<compile_context>
chip_gen: v7x
topology: tpu7x:2x2x1
jax: 0.10.0
libtpu: 0.0.40
codegen_flags: <defaults>
</compile_context>

<pallas_src>
import jax
import jax.numpy as jnp
import numpy as np
from jax.experimental import pallas as pl
from jax.experimental.pallas import tpu as pltpu


def reward_mlp_kernel(h_ref, s_ref, w1h_ref, w1s_ref, b1_ref,
                      w2_ref, b2_ref, w3_ref, b3_ref, o_ref):
    f32 = jnp.float32

    # fc1 with the concat folded in: [h | s] @ [[w1_h], [w1_s]] + b1
    h1 = (jnp.dot(h_ref[...], w1h_ref[...], preferred_element_type=f32)
          + jnp.dot(s_ref[...], w1s_ref[...], preferred_element_type=f32)
          + b1_ref[...].astype(f32))
    h1 = jnp.maximum(h1, 0.0)                      # ReLU on the f32 accumulator

    # fc2 (cast activation back to the weight dtype before the MXU push)
    h2 = (jnp.dot(h1.astype(w2_ref.dtype), w2_ref[...], preferred_element_type=f32)
          + b2_ref[...].astype(f32))
    h2 = jnp.maximum(h2, 0.0)

    # fc3 (out_features == 1): VPU multiply + lane reduction instead of an
    # N=1 MXU matmul.  w3 is a (1, hidden) row.
    out = jnp.sum(h2 * w3_ref[...].astype(f32), axis=-1, keepdims=True)
    out = out + b3_ref[...].astype(f32)
    o_ref[...] = out.astype(o_ref.dtype)


def _round_up(x, m):
    return (x + m - 1) // m * m


def reward_model_forward(h, s, params, *, block_b=1024):
    """h: (B, hidden_dim), s: (B, state_dim) -> (B, 1) float32."""
    w1h, w1s, b1, w2, b2, w3, b3 = params
    B, Hd = h.shape
    Sd = s.shape[1]

    # Sublane granularity: 8 rows for f32, 16 for bf16 (packed sublanes).
    sub = 16 if h.dtype == jnp.bfloat16 else 8
    TB = min(block_b, _round_up(B, sub))
    Bp = _round_up(B, TB)
    if Bp != B:
        pad = Bp - B
        h = jnp.pad(h, ((0, pad), (0, 0)))
        s = jnp.pad(s, ((0, pad), (0, 0)))

    grid = (pl.cdiv(Bp, TB),)
    resident = lambda i: (0, 0)   # weights/biases stay VMEM-resident per step

    out = pl.pallas_call(
        reward_mlp_kernel,
        out_shape=jax.ShapeDtypeStruct((Bp, 1), jnp.float32),
        grid_spec=pltpu.PrefetchScalarGridSpec(
            num_scalar_prefetch=0,
            grid=grid,
            in_specs=[
                pl.BlockSpec((TB, Hd), lambda i: (i, 0)),   # h tile
                pl.BlockSpec((TB, Sd), lambda i: (i, 0)),   # s tile
                pl.BlockSpec((Hd, Hd), resident),           # w1_h
                pl.BlockSpec((Sd, Hd), resident),           # w1_s
                pl.BlockSpec((1, Hd), resident),            # b1
                pl.BlockSpec((Hd, Hd), resident),           # w2
                pl.BlockSpec((1, Hd), resident),            # b2
                pl.BlockSpec((1, Hd), resident),            # w3 (row)
                pl.BlockSpec((1, 1), resident),             # b3
            ],
            out_specs=pl.BlockSpec((TB, 1), lambda i: (i, 0)),
        ),
        compiler_params=pltpu.CompilerParams(
            dimension_semantics=("parallel",)),
    )(h, s, w1h, w1s, b1, w2, b2, w3, b3)

    return out[:B]


def init_params(key, hidden_dim, state_dim, dtype=jnp.float32):
    """PyTorch-style uniform(+/- 1/sqrt(fan_in)) init; fc1 weight pre-split."""
    in_dim = hidden_dim + state_dim

    def linear(key, fan_in, fan_out):
        kw, kb = jax.random.split(key)
        bound = 1.0 / np.sqrt(fan_in)
        w = jax.random.uniform(kw, (fan_in, fan_out), jnp.float32, -bound, bound)
        b = jax.random.uniform(kb, (1, fan_out), jnp.float32, -bound, bound)
        return w, b

    k1, k2, k3 = jax.random.split(key, 3)
    w1, b1 = linear(k1, in_dim, hidden_dim)
    w2, b2 = linear(k2, hidden_dim, hidden_dim)
    w3, b3 = linear(k3, hidden_dim, 1)

    w1h, w1s = w1[:hidden_dim], w1[hidden_dim:]
    w3_row = w3.T                      # (1, hidden) row for the VPU reduction

    params = (w1h, w1s, b1, w2, b2, w3_row, b3)
    return tuple(p.astype(dtype) for p in params)


def reference_forward(h, s, params):
    w1h, w1s, b1, w2, b2, w3, b3 = params
    f32 = lambda a: a.astype(jnp.float32)
    x = jnp.concatenate([f32(h), f32(s)], axis=-1)
    w1 = jnp.concatenate([f32(w1h), f32(w1s)], axis=0)
    x = jnp.maximum(x @ w1 + f32(b1), 0.0)
    x = jnp.maximum(x @ f32(w2) + f32(b2), 0.0)
    return x @ f32(w3).T + f32(b3)


if __name__ == "__main__":
    hidden_dim = 32
    state_dim = 16
    batch = 8

    key = jax.random.PRNGKey(0)
    k_params, k_h, k_s = jax.random.split(key, 3)

    # --- f32 path (tight tolerance) -------------------------------------
    params = init_params(k_params, hidden_dim, state_dim, dtype=jnp.float32)
    h = jax.random.normal(k_h, (batch, hidden_dim), jnp.float32)
    s = jax.random.normal(k_s, (batch, state_dim), jnp.float32)

    out = jax.block_until_ready(reward_model_forward(h, s, params))
    ref = jax.block_until_ready(reference_forward(h, s, params))
    assert out.shape == (batch, 1), out.shape
    np.testing.assert_allclose(np.asarray(out), np.asarray(ref),
                               rtol=1e-5, atol=1e-5)

    # --- bf16 path (halved HBM traffic; f32 accumulation in-kernel) -----
    params_bf16 = tuple(p.astype(jnp.bfloat16) for p in params)
    h_bf16 = h.astype(jnp.bfloat16)
    s_bf16 = s.astype(jnp.bfloat16)

    out_bf16 = jax.block_until_ready(
        reward_model_forward(h_bf16, s_bf16, params_bf16))
    ref_bf16 = jax.block_until_ready(
        reference_forward(h_bf16, s_bf16, params_bf16))
    assert out_bf16.shape == (batch, 1), out_bf16.shape
    np.testing.assert_allclose(np.asarray(out_bf16), np.asarray(ref_bf16),
                               rtol=5e-2, atol=5e-2)

    print("KERNEL_OK")
</pallas_src>

<mosaic_0001>
module attributes {stable_mosaic.version = 11 : i64} {
  func.func @reward_mlp_kernel(%arg0: i32, %arg1: memref<8x32xf32, #tpu.memory_space<vmem>>, %arg2: memref<8x16xf32, #tpu.memory_space<vmem>>, %arg3: memref<32x32xf32, #tpu.memory_space<vmem>>, %arg4: memref<16x32xf32, #tpu.memory_space<vmem>>, %arg5: memref<1x32xf32, #tpu.memory_space<vmem>>, %arg6: memref<32x32xf32, #tpu.memory_space<vmem>>, %arg7: memref<1x32xf32, #tpu.memory_space<vmem>>, %arg8: memref<1x32xf32, #tpu.memory_space<vmem>>, %arg9: memref<1x1xf32, #tpu.memory_space<vmem>>, %arg10: memref<8x1xf32, #tpu.memory_space<vmem>>) attributes {dimension_semantics = [#tpu.dimension_semantics<parallel>], iteration_bounds = array<i64: 1>, scalar_prefetch = 0 : i64, scratch_operands = 0 : i64, tpu.core_type = #tpu.core_type<tc>, window_params = [{transform_indices = @transform_0, window_bounds = array<i64: 8, 32>}, {transform_indices = @transform_1, window_bounds = array<i64: 8, 16>}, {pipeline_mode = #tpu.pipeline_mode<synchronous>, transform_indices = @transform_2, window_bounds = array<i64: 32, 32>}, {pipeline_mode = #tpu.pipeline_mode<synchronous>, transform_indices = @transform_3, window_bounds = array<i64: 16, 32>}, {pipeline_mode = #tpu.pipeline_mode<synchronous>, transform_indices = @transform_4, window_bounds = array<i64: 1, 32>}, {pipeline_mode = #tpu.pipeline_mode<synchronous>, transform_indices = @transform_5, window_bounds = array<i64: 32, 32>}, {pipeline_mode = #tpu.pipeline_mode<synchronous>, transform_indices = @transform_6, window_bounds = array<i64: 1, 32>}, {pipeline_mode = #tpu.pipeline_mode<synchronous>, transform_indices = @transform_7, window_bounds = array<i64: 1, 32>}, {pipeline_mode = #tpu.pipeline_mode<synchronous>, transform_indices = @transform_8, window_bounds = array<i64: 1, 1>}, {transform_indices = @transform_9, window_bounds = array<i64: 8, 1>}]} {
    %c0 = arith.constant 0 : index
    %c0_0 = arith.constant 0 : index
    %0 = vector.load %arg1[%c0, %c0_0] : memref<8x32xf32, #tpu.memory_space<vmem>>, vector<8x32xf32>
    %c0_1 = arith.constant 0 : index
    %c0_2 = arith.constant 0 : index
    %1 = vector.load %arg3[%c0_1, %c0_2] : memref<32x32xf32, #tpu.memory_space<vmem>>, vector<32x32xf32>
    %cst = arith.constant dense<0.000000e+00> : vector<8x32xf32>
    %2 = tpu.matmul %0, %1, %cst {dimension_numbers = #tpu.dot_dimension_numbers<[1], [0], [0], [1], [0, 0, 1, 1], [], []>} : vector<8x32xf32>, vector<32x32xf32>, vector<8x32xf32> -> vector<8x32xf32>
    %c0_3 = arith.constant 0 : index
    %c0_4 = arith.constant 0 : index
    %3 = vector.load %arg2[%c0_3, %c0_4] : memref<8x16xf32, #tpu.memory_space<vmem>>, vector<8x16xf32>
    %c0_5 = arith.constant 0 : index
    %c0_6 = arith.constant 0 : index
    %4 = vector.load %arg4[%c0_5, %c0_6] : memref<16x32xf32, #tpu.memory_space<vmem>>, vector<16x32xf32>
    %cst_7 = arith.constant dense<0.000000e+00> : vector<8x32xf32>
    %5 = tpu.matmul %3, %4, %cst_7 {dimension_numbers = #tpu.dot_dimension_numbers<[1], [0], [0], [1], [0, 0, 1, 1], [], []>} : vector<8x16xf32>, vector<16x32xf32>, vector<8x32xf32> -> vector<8x32xf32>
    %6 = arith.addf %2, %5 : vector<8x32xf32>
    %c0_8 = arith.constant 0 : index
    %c0_9 = arith.constant 0 : index
    %7 = vector.load %arg5[%c0_8, %c0_9] : memref<1x32xf32, #tpu.memory_space<vmem>>, vector<1x32xf32>
    %8 = vector.broadcast %7 : vector<1x32xf32> to vector<8x32xf32>
    %9 = arith.addf %6, %8 : vector<8x32xf32>
    %cst_10 = arith.constant 0.000000e+00 : f32
    %10 = vector.broadcast %cst_10 : f32 to vector<8x32xf32>
    %11 = arith.maximumf %9, %10 : vector<8x32xf32>
    %c0_11 = arith.constant 0 : index
    %c0_12 = arith.constant 0 : index
    %12 = vector.load %arg6[%c0_11, %c0_12] : memref<32x32xf32, #tpu.memory_space<vmem>>, vector<32x32xf32>
    %cst_13 = arith.constant dense<0.000000e+00> : vector<8x32xf32>
    %13 = tpu.matmul %11, %12, %cst_13 {dimension_numbers = #tpu.dot_dimension_numbers<[1], [0], [0], [1], [0, 0, 1, 1], [], []>} : vector<8x32xf32>, vector<32x32xf32>, vector<8x32xf32> -> vector<8x32xf32>
    %c0_14 = arith.constant 0 : index
    %c0_15 = arith.constant 0 : index
    %14 = vector.load %arg7[%c0_14, %c0_15] : memref<1x32xf32, #tpu.memory_space<vmem>>, vector<1x32xf32>
    %15 = vector.broadcast %14 : vector<1x32xf32> to vector<8x32xf32>
    %16 = arith.addf %13, %15 : vector<8x32xf32>
    %cst_16 = arith.constant 0.000000e+00 : f32
    %17 = vector.broadcast %cst_16 : f32 to vector<8x32xf32>
    %18 = arith.maximumf %16, %17 : vector<8x32xf32>
    %c0_17 = arith.constant 0 : index
    %c0_18 = arith.constant 0 : index
    %19 = vector.load %arg8[%c0_17, %c0_18] : memref<1x32xf32, #tpu.memory_space<vmem>>, vector<1x32xf32>
    %20 = vector.broadcast %19 : vector<1x32xf32> to vector<8x32xf32>
    %21 = arith.mulf %18, %20 : vector<8x32xf32>
    %cst_19 = arith.constant dense<0.000000e+00> : vector<8xf32>
    %22 = vector.multi_reduction <add>, %21, %cst_19 [1] : vector<8x32xf32> to vector<8xf32>
    %23 = vector.shape_cast %22 : vector<8xf32> to vector<8x1xf32>
    %c0_20 = arith.constant 0 : index
    %c0_21 = arith.constant 0 : index
    %24 = vector.load %arg9[%c0_20, %c0_21] : memref<1x1xf32, #tpu.memory_space<vmem>>, vector<1x1xf32>
    %25 = vector.broadcast %24 : vector<1x1xf32> to vector<8x1xf32>
    %26 = arith.addf %23, %25 : vector<8x1xf32>
    %c0_22 = arith.constant 0 : index
    %c0_23 = arith.constant 0 : index
    %27 = vector.load %arg10[%c0_22, %c0_23] : memref<8x1xf32, #tpu.memory_space<vmem>>, vector<8x1xf32>
    tpu.vector_store %arg10[%c0_22, %c0_23], %26 {strides = array<i32>} : memref<8x1xf32, #tpu.memory_space<vmem>>, vector<8x1xf32>,
    return
  }
  func.func @transform_0(%arg0: i32) -> (i32, i32) {
    %c0_i32 = arith.constant 0 : i32
    %c0_i32_0 = arith.constant 0 : i32
    return %arg0, %c0_i32 : i32, i32
  }
  func.func @transform_1(%arg0: i32) -> (i32, i32) {
    %c0_i32 = arith.constant 0 : i32
    %c0_i32_0 = arith.constant 0 : i32
    return %arg0, %c0_i32 : i32, i32
  }
  func.func @transform_2(%arg0: i32) -> (i32, i32) {
    %c0_i32 = arith.constant 0 : i32
    %c0_i32_0 = arith.constant 0 : i32
    %c0_i32_1 = arith.constant 0 : i32
    return %c0_i32, %c0_i32_0 : i32, i32
  }
  func.func @transform_3(%arg0: i32) -> (i32, i32) {
    %c0_i32 = arith.constant 0 : i32
    %c0_i32_0 = arith.constant 0 : i32
    %c0_i32_1 = arith.constant 0 : i32
    return %c0_i32, %c0_i32_0 : i32, i32
  }
  func.func @transform_4(%arg0: i32) -> (i32, i32) {
    %c0_i32 = arith.constant 0 : i32
    %c0_i32_0 = arith.constant 0 : i32
    %c0_i32_1 = arith.constant 0 : i32
    return %c0_i32, %c0_i32_0 : i32, i32
  }
  func.func @transform_5(%arg0: i32) -> (i32, i32) {
    %c0_i32 = arith.constant 0 : i32
    %c0_i32_0 = arith.constant 0 : i32
    %c0_i32_1 = arith.constant 0 : i32
    return %c0_i32, %c0_i32_0 : i32, i32
  }
  func.func @transform_6(%arg0: i32) -> (i32, i32) {
    %c0_i32 = arith.constant 0 : i32
    %c0_i32_0 = arith.constant 0 : i32
    %c0_i32_1 = arith.constant 0 : i32
    return %c0_i32, %c0_i32_0 : i32, i32
  }
  func.func @transform_7(%arg0: i32) -> (i32, i32) {
    %c0_i32 = arith.constant 0 : i32
    %c0_i32_0 = arith.constant 0 : i32
    %c0_i32_1 = arith.constant 0 : i32
    return %c0_i32, %c0_i32_0 : i32, i32
  }
  func.func @transform_8(%arg0: i32) -> (i32, i32) {
    %c0_i32 = arith.constant 0 : i32
    %c0_i32_0 = arith.constant 0 : i32
    %c0_i32_1 = arith.constant 0 : i32
    return %c0_i32, %c0_i32_0 : i32, i32
  }
  func.func @transform_9(%arg0: i32) -> (i32, i32) {
    %c0_i32 = arith.constant 0 : i32
    %c0_i32_0 = arith.constant 0 : i32
    return %arg0, %c0_i32 : i32, i32
  }
}

</mosaic_0001>

<llo_original>
// kernel: tpu_custom_call.1
$region0: #{tpu_custom_call.1}
  #allocation0 [shape = 'u32[]', space=smem, size = 0x4, offset = 0x4, fixed_abs, tag = 'smem constant byte address 0x4 - core index']
  #allocation1 [shape = 'u32[144,128]{1,0:T(1,128)}', space=vmem, size = 0x12000, scoped, tag = 'internal scratch']
  #allocation2 [shape = 'f32[1,1]{1,0:T(1,128)S(1)}', space=vmem, size = 0x200, scoped, tag = 'scoped memory for tpu_custom_call.1']
  %s0 = inlined_call_operand.hbm [shape: f32[8,32], index: 0, kind: input, shape index: {}]
  %s1 = inlined_call_operand.hbm [shape: f32[8,16], index: 1, kind: input, shape index: {}]
  %s2 = inlined_call_operand.hbm [shape: f32[32,32], index: 2, kind: input, shape index: {}]
  %s3 = inlined_call_operand.hbm [shape: f32[16,32], index: 3, kind: input, shape index: {}]
  %s4 = inlined_call_operand.vmem [shape: f32[1,32], index: 4, kind: input, shape index: {}]
  %s5 = inlined_call_operand.hbm [shape: f32[32,32], index: 5, kind: input, shape index: {}]
  %s6 = inlined_call_operand.vmem [shape: f32[1,32], index: 6, kind: input, shape index: {}]
  %s7 = inlined_call_operand.vmem [shape: f32[1,32], index: 7, kind: input, shape index: {}]
  %s8 = inlined_call_operand.<no memory space> [shape: f32[1,1], index: 8, kind: input, shape index: {}]
  %s9 = inlined_call_operand.vmem [shape: f32[8,1], index: 9, kind: output, shape index: {}]
  %s10 = sld [smem:[#allocation0]]
  $region66: #{tpu_custom_call.1} parent=0
    _
  %s12 = ssub.s32 1, %s10
  %s13 = scalar_select 0, %s12, %s10
  %v14 = vstv %s8
  %15 = vst [vmem:[#allocation2] sm:$0x1] %v14
  $region1: #{tpu_custom_call.1} parent=0
    #allocation3 [shape = 'u8[4096]{0}', space=vmem, size = 0x1000, scoped, tag = 'input window, operand 0, single buffered']
    #allocation4 [shape = 's32[1]{0}', space=sflag, size = 0x4, scoped, tag = 'scoped memory for tpu_custom_call.1']
    #allocation5 [shape = 'u8[4096]{0}', space=vmem, size = 0x1000, scoped, tag = 'input window, operand 1, single buffered']
    #allocation6 [shape = 's32[1]{0}', space=sflag, size = 0x4, scoped, tag = 'scoped memory for tpu_custom_call.1']
    #allocation7 [shape = 'u8[16384]{0}', space=vmem, size = 0x4000, scoped, tag = 'input window, operand 2, single buffered']
    #allocation8 [shape = 'u8[8192]{0}', space=vmem, size = 0x2000, scoped, tag = 'input window, operand 3, single buffered']
    #allocation9 [shape = 's32[1]{0}', space=sflag, size = 0x4, scoped, tag = 'scoped memory for tpu_custom_call.1']
    #allocation10 [shape = 'u8[16384]{0}', space=vmem, size = 0x4000, scoped, tag = 'input window, operand 5, single buffered']
    %16 = vsyncpa [#allocation4], 0
    %17 = vsyncpa [#allocation6], 0
    %18 = vsyncpa [#allocation9], 0
    // Predicated region
    $region2: #{tpu_custom_call.1} parent=1 // pred_check
      _
    $region3: #{tpu_custom_call.1} parent=1 // pred_check_branch
      %20 = sbr.rel (0) target = $region5
    $region4: #{tpu_custom_call.1} parent=1 // pred_region
      %s22 = ssub.s32 128, 128
      %23 = vsyncadd [#allocation4], %s22
      %s25 = sshll.u32 [#allocation3], 4
      %s26 = int_to_ptr.vmem [resolvable:$true] %s25
      %28 = dma.hbm_to_vmem [thread:$0]  %s0, 128, %s26, [#allocation4]
    $region5: #{tpu_custom_call.1} parent=1 // pred_fallthru
      _
    // Predicated region
    $region6: #{tpu_custom_call.1} parent=1 // pred_check
      _
    $region7: #{tpu_custom_call.1} parent=1 // pred_check_branch
      %30 = sbr.rel (0) target = $region9
    $region8: #{tpu_custom_call.1} parent=1 // pred_region
      %s32 = ssub.s32 128, 128
      %33 = vsyncadd [#allocation6], %s32
      %s35 = sshll.u32 [#allocation5], 4
      %s36 = int_to_ptr.vmem [resolvable:$true] %s35
      %38 = dma.hbm_to_vmem [thread:$0]  %s1, 128, %s36, [#allocation6]
    $region9: #{tpu_custom_call.1} parent=1 // pred_fallthru
      _
    // Predicated region
    $region10: #{tpu_custom_call.1} parent=1 // pred_check
      _
    $region11: #{tpu_custom_call.1} parent=1 // pred_check_branch
      %40 = sbr.rel (0) target = $region13
    $region12: #{tpu_custom_call.1} parent=1 // pred_region
      %s42 = ssub.s32 512, 512
      %43 = vsyncadd [#allocation6], %s42
      %s44 = sshll.u32 [#allocation7], 4
      %s45 = int_to_ptr.vmem [resolvable:$true] %s44
      %50 = dma.hbm_to_vmem [thread:$0]  %s2, 512, %s45, [#allocation6], 128, 128, 8
    $region13: #{tpu_custom_call.1} parent=1 // pred_fallthru
      _
    // Predicated region
    $region14: #{tpu_custom_call.1} parent=1 // pred_check
      _
    $region15: #{tpu_custom_call.1} parent=1 // pred_check_branch
      %52 = sbr.rel (0) target = $region17
    $region16: #{tpu_custom_call.1} parent=1 // pred_region
      %s54 = ssub.s32 256, 256
      %55 = vsyncadd [#allocation9], %s54
      %s56 = sshll.u32 [#allocation8], 4
      %s57 = int_to_ptr.vmem [resolvable:$true] %s56
      %62 = dma.hbm_to_vmem [thread:$0]  %s3, 256, %s57, [#allocation9], 128, 128, 8
    $region17: #{tpu_custom_call.1} parent=1 // pred_fallthru
      _
    // Predicated region
    $region18: #{tpu_custom_call.1} parent=1 // pred_check
      _
    $region19: #{tpu_custom_call.1} parent=1 // pred_check_branch
      %64 = sbr.rel (0) target = $region21
    $region20: #{tpu_custom_call.1} parent=1 // pred_region
      _
    $region21: #{tpu_custom_call.1} parent=1 // pred_fallthru
      _
    // Predicated region
    $region22: #{tpu_custom_call.1} parent=1 // pred_check
      _
    $region23: #{tpu_custom_call.1} parent=1 // pred_check_branch
      %66 = sbr.rel (0) target = $region25
    $region24: #{tpu_custom_call.1} parent=1 // pred_region
      %s68 = ssub.s32 512, 512
      %69 = vsyncadd [#allocation9], %s68
      %s70 = sshll.u32 [#allocation10], 4
      %s71 = int_to_ptr.vmem [resolvable:$true] %s70
      %76 = dma.hbm_to_vmem [thread:$0]  %s5, 512, %s71, [#allocation9], 128, 128, 8
    $region25: #{tpu_custom_call.1} parent=1 // pred_fallthru
      _
    // Predicated region
    $region26: #{tpu_custom_call.1} parent=1 // pred_check
      _
    $region27: #{tpu_custom_call.1} parent=1 // pred_check_branch
      %78 = sbr.rel (0) target = $region29
    $region28: #{tpu_custom_call.1} parent=1 // pred_region
      _
    $region29: #{tpu_custom_call.1} parent=1 // pred_fallthru
      _
    // Predicated region
    $region30: #{tpu_custom_call.1} parent=1 // pred_check
      _
    $region31: #{tpu_custom_call.1} parent=1 // pred_check_branch
      %80 = sbr.rel (0) target = $region33
    $region32: #{tpu_custom_call.1} parent=1 // pred_region
      _
    $region33: #{tpu_custom_call.1} parent=1 // pred_fallthru
      _
    // Predicated region
    $region34: #{tpu_custom_call.1} parent=1 // pred_check
      _
    $region35: #{tpu_custom_call.1} parent=1 // pred_check_branch
      %82 = sbr.rel (0) target = $region37
    $region36: #{tpu_custom_call.1} parent=1 // pred_region
      _
    $region37: #{tpu_custom_call.1} parent=1 // pred_fallthru
      _
    // Predicated region
    $region38: #{tpu_custom_call.1} parent=1 // pred_check
      _
    $region39: #{tpu_custom_call.1} parent=1 // pred_check_branch
      %84 = sbr.rel (0) target = $region41
    $region40: #{tpu_custom_call.1} parent=1 // pred_region
      %85 = dma.done [#allocation4], 128
    $region41: #{tpu_custom_call.1} parent=1 // pred_fallthru
      _
    // Predicated region
    $region42: #{tpu_custom_call.1} parent=1 // pred_check
      _
    $region43: #{tpu_custom_call.1} parent=1 // pred_check_branch
      %87 = sbr.rel (0) target = $region45
    $region44: #{tpu_custom_call.1} parent=1 // pred_region
      %88 = dma.done [#allocation6], 128
    $region45: #{tpu_custom_call.1} parent=1 // pred_fallthru
      _
    // Predicated region
    $region46: #{tpu_custom_call.1} parent=1 // pred_check
      _
    $region47: #{tpu_custom_call.1} parent=1 // pred_check_branch
      %90 = sbr.rel (0) target = $region49
    $region48: #{tpu_custom_call.1} parent=1 // pred_region
      %91 = dma.done [#allocation6], 512
    $region49: #{tpu_custom_call.1} parent=1 // pred_fallthru
      _
    // Predicated region
    $region50: #{tpu_custom_call.1} parent=1 // pred_check
      _
    $region51: #{tpu_custom_call.1} parent=1 // pred_check_branch
      %93 = sbr.rel (0) target = $region53
    $region52: #{tpu_custom_call.1} parent=1 // pred_region
      %94 = dma.done [#allocation9], 256
    $region53: #{tpu_custom_call.1} parent=1 // pred_fallthru
      _
    // Predicated region
    $region54: #{tpu_custom_call.1} parent=1 // pred_check
      _
    $region55: #{tpu_custom_call.1} parent=1 // pred_check_branch
      %96 = sbr.rel (0) target = $region57
    $region56: #{tpu_custom_call.1} parent=1 // pred_region
      %97 = dma.done [#allocation9], 512
    $region57: #{tpu_custom_call.1} parent=1 // pred_fallthru
      _
    %v98 = vld [vmem:[#allocation3] sm:$0xff]
    %v99 = vld [vmem:[#allocation7] sm:$0xff]
    %v100 = vld [vmem:[#allocation7 + $0x8] sm:$0xff]
    %v101 = vld [vmem:[#allocation7 + $0x10] sm:$0xff]
    %v102 = vld [vmem:[#allocation7 + $0x18] sm:$0xff]
    %v103 = vld [vmem:[#allocation5] sm:$0xff]
    %v104 = vld [vmem:[#allocation8] sm:$0xff]
    %v105 = vld [vmem:[#allocation8 + $0x8] sm:$0xff]
    %vm106 = vcmask 130048
    %v108 = vsel %vm106, %v103, 0
    %110 = vmatprep.subr.mxu0 0.0
    %111 = vmatpush1.msra.mxu0 %v104
    %112 = vmatprep.subr.mxu0 0.0
    %113 = vmatpush1.msra.mxu0 %v105
    %114 = vmatprep.subr.mxu0 0.0
    %115 = vmatpush1.msra.mxu0 0.0
    %116 = vmatprep.subr.mxu0 0.0
    %117 = vmatpush1.msra.mxu0 0.0
    %118 = vmatprep.subr.mxu0 0.0
    %119 = vmatpush1.msra.mxu0 0.0
    %120 = vmatprep.subr.mxu0 0.0
    %121 = vmatpush1.msra.mxu0 0.0
    %122 = vmatprep.subr.mxu0 0.0
    %123 = vmatpush1.msra.mxu0 0.0
    %124 = vmatprep.subr.mxu0 0.0
    %125 = vmatpush1.msra.mxu0 0.0
    %126 = vmatprep.subr.mxu0 0.0
    %127 = vmatpush1.msra.mxu0 0.0
    %128 = vmatprep.subr.mxu0 0.0
    %129 = vmatpush1.msra.mxu0 0.0
    %130 = vmatprep.subr.mxu0 0.0
    %131 = vmatpush1.msra.mxu0 0.0
    %132 = vmatprep.subr.mxu0 0.0
    %133 = vmatpush1.msra.mxu0 0.0
    %134 = vmatprep.subr.mxu0 0.0
    %135 = vmatpush1.msra.mxu0 0.0
    %136 = vmatprep.subr.mxu0 0.0
    %137 = vmatpush1.msra.mxu0 0.0
    %138 = vmatprep.subr.mxu0 0.0
    %139 = vmatpush1.msra.mxu0 0.0
    %140 = vmatprep.subr.mxu0 0.0
    %141 = vmatpush1.msra.mxu0 0.0
    %142 = vmatprep.subr.mxu0 0.0
    %143 = vmatpush1.msra.mxu0 0.0
    %144 = vmatprep.subr.mxu0 0.0
    %145 = vmatpush1.msra.mxu0 0.0
    %146 = vmatprep.subr.mxu0 0.0
    %147 = vmatpush1.msra.mxu0 0.0
    %148 = vmatprep.subr.mxu0 0.0
    %149 = vmatpush1.msra.mxu0 0.0
    %150 = vmatprep.subr.mxu0 0.0
    %151 = vmatpush1.msra.mxu0 0.0
    %152 = vmatprep.subr.mxu0 0.0
    %153 = vmatpush1.msra.mxu0 0.0
    %154 = vmatprep.subr.mxu0 0.0
    %155 = vmatpush1.msra.mxu0 0.0
    %156 = vmatprep.subr.mxu0 0.0
    %157 = vmatpush1.msra.mxu0 0.0
    %158 = vmatprep.subr.mxu0 0.0
    %159 = vmatpush1.msra.mxu0 0.0
    %160 = vmatprep.subr.mxu0 0.0
    %161 = vmatpush1.msra.mxu0 0.0
    %162 = vmatprep.subr.mxu0 0.0
    %163 = vmatpush1.msra.mxu0 0.0
    %164 = vmatprep.subr.mxu0 0.0
    %165 = vmatpush1.msra.mxu0 0.0
    %166 = vmatprep.subr.mxu0 0.0
    %167 = vmatpush1.msra.mxu0 0.0
    %168 = vmatprep.subr.mxu0 0.0
    %169 = vmatpush1.msra.mxu0 0.0
    %170 = vmatprep.subr.mxu0 0.0
    %171 = vmatpush1.msra.mxu0 0.0
    %172 = vmatprep.subr.mxu0 0.0
    %173 = vmatpush1.msra.mxu0 0.0
    %174 = vmatprep.mubr.f32.mxu0 0.0
    %175 = vmatmul.mubr.f32.gmra.mrb[0].mxu0 %v108
    %v176 = vpop.f32.mrb[0].mxu0
    %v177 = vadd.f32 0.0, %v176
    %v178 = vpop.f32.mrb[0].mxu0
    %179 = vdwg.mxu0
    %vm180 = vcmask 261120
    %v182 = vsel %vm180, %v98, 0
    %184 = vmatprep.subr.mxu0 0.0
    %185 = vmatpush1.msra.mxu0 %v99
    %186 = vmatprep.subr.mxu0 0.0
    %187 = vmatpush1.msra.mxu0 %v100
    %188 = vmatprep.subr.mxu0 0.0
    %189 = vmatpush1.msra.mxu0 %v101
    %190 = vmatprep.subr.mxu0 0.0
    %191 = vmatpush1.msra.mxu0 %v102
    %192 = vmatprep.subr.mxu0 0.0
    %193 = vmatpush1.msra.mxu0 0.0
    %194 = vmatprep.subr.mxu0 0.0
    %195 = vmatpush1.msra.mxu0 0.0
    %196 = vmatprep.subr.mxu0 0.0
    %197 = vmatpush1.msra.mxu0 0.0
    %198 = vmatprep.subr.mxu0 0.0
    %199 = vmatpush1.msra.mxu0 0.0
    %200 = vmatprep.subr.mxu0 0.0
    %201 = vmatpush1.msra.mxu0 0.0
    %202 = vmatprep.subr.mxu0 0.0
    %203 = vmatpush1.msra.mxu0 0.0
    %204 = vmatprep.subr.mxu0 0.0
    %205 = vmatpush1.msra.mxu0 0.0
    %206 = vmatprep.subr.mxu0 0.0
    %207 = vmatpush1.msra.mxu0 0.0
    %208 = vmatprep.subr.mxu0 0.0
    %209 = vmatpush1.msra.mxu0 0.0
    %210 = vmatprep.subr.mxu0 0.0
    %211 = vmatpush1.msra.mxu0 0.0
    %212 = vmatprep.subr.mxu0 0.0
    %213 = vmatpush1.msra.mxu0 0.0
    %214 = vmatprep.subr.mxu0 0.0
    %215 = vmatpush1.msra.mxu0 0.0
    %216 = vmatprep.subr.mxu0 0.0
    %217 = vmatpush1.msra.mxu0 0.0
    %218 = vmatprep.subr.mxu0 0.0
    %219 = vmatpush1.msra.mxu0 0.0
    %220 = vmatprep.subr.mxu0 0.0
    %221 = vmatpush1.msra.mxu0 0.0
    %222 = vmatprep.subr.mxu0 0.0
    %223 = vmatpush1.msra.mxu0 0.0
    %224 = vmatprep.subr.mxu0 0.0
    %225 = vmatpush1.msra.mxu0 0.0
    %226 = vmatprep.subr.mxu0 0.0
    %227 = vmatpush1.msra.mxu0 0.0
    %228 = vmatprep.subr.mxu0 0.0
    %229 = vmatpush1.msra.mxu0 0.0
    %230 = vmatprep.subr.mxu0 0.0
    %231 = vmatpush1.msra.mxu0 0.0
    %232 = vmatprep.subr.mxu0 0.0
    %233 = vmatpush1.msra.mxu0 0.0
    %234 = vmatprep.subr.mxu0 0.0
    %235 = vmatpush1.msra.mxu0 0.0
    %236 = vmatprep.subr.mxu0 0.0
    %237 = vmatpush1.msra.mxu0 0.0
    %238 = vmatprep.subr.mxu0 0.0
    %239 = vmatpush1.msra.mxu0 0.0
    %240 = vmatprep.subr.mxu0 0.0
    %241 = vmatpush1.msra.mxu0 0.0
    %242 = vmatprep.subr.mxu0 0.0
    %243 = vmatpush1.msra.mxu0 0.0
    %244 = vmatprep.subr.mxu0 0.0
    %245 = vmatpush1.msra.mxu0 0.0
    %246 = vmatprep.subr.mxu0 0.0
    %247 = vmatpush1.msra.mxu0 0.0
    %248 = vmatprep.mubr.f32.mxu0 0.0
    %249 = vmatmul.mubr.f32.gmra.mrb[0].mxu0 %v182
    %v250 = vpop.f32.mrb[0].mxu0
    %v251 = vadd.f32 %v177, %v250
    %v252 = vpop.f32.mrb[0].mxu0
    %253 = vdwg.mxu0
    %v254 = vld [vmem:[%s4] sm:$0x1]
    %v256 = vlaneseq
    %v257 = vshrl.u32 %v256, 7
    %v258 = vsub.s32 0, %v257
    %v259 = vrot.slane %v254, %v258
    %v261 = vadd.f32 %v251, %v259
    %v262 = vmax.f32 %v261, 0.0
    %v263 = vld [vmem:[#allocation10] sm:$0xff]
    %v264 = vld [vmem:[#allocation10 + $0x8] sm:$0xff]
    %v265 = vld [vmem:[#allocation10 + $0x10] sm:$0xff]
    %v266 = vld [vmem:[#allocation10 + $0x18] sm:$0xff]
    %v267 = vld [vmem:[%s6] sm:$0x1]
    %v269 = vlaneseq
    %v270 = vshrl.u32 %v269, 7
    %v271 = vsub.s32 0, %v270
    %v272 = vrot.slane %v267, %v271
    %v275 = vsel %vm180, %v262, 0
    %277 = vmatprep.subr.mxu0 0.0
    %278 = vmatpush1.msra.mxu0 %v263
    %279 = vmatprep.subr.mxu0 0.0
    %280 = vmatpush1.msra.mxu0 %v264
    %281 = vmatprep.subr.mxu0 0.0
    %282 = vmatpush1.msra.mxu0 %v265
    %283 = vmatprep.subr.mxu0 0.0
    %284 = vmatpush1.msra.mxu0 %v266
    %285 = vmatprep.subr.mxu0 0.0
    %286 = vmatpush1.msra.mxu0 0.0
    %287 = vmatprep.subr.mxu0 0.0
    %288 = vmatpush1.msra.mxu0 0.0
    %289 = vmatprep.subr.mxu0 0.0
    %290 = vmatpush1.msra.mxu0 0.0
    %291 = vmatprep.subr.mxu0 0.0
    %292 = vmatpush1.msra.mxu0 0.0
    %293 = vmatprep.subr.mxu0 0.0
    %294 = vmatpush1.msra.mxu0 0.0
    %295 = vmatprep.subr.mxu0 0.0
    %296 = vmatpush1.msra.mxu0 0.0
    %297 = vmatprep.subr.mxu0 0.0
    %298 = vmatpush1.msra.mxu0 0.0
    %299 = vmatprep.subr.mxu0 0.0
    %300 = vmatpush1.msra.mxu0 0.0
    %301 = vmatprep.subr.mxu0 0.0
    %302 = vmatpush1.msra.mxu0 0.0
    %303 = vmatprep.subr.mxu0 0.0
    %304 = vmatpush1.msra.mxu0 0.0
    %305 = vmatprep.subr.mxu0 0.0
    %306 = vmatpush1.msra.mxu0 0.0
    %307 = vmatprep.subr.mxu0 0.0
    %308 = vmatpush1.msra.mxu0 0.0
    %309 = vmatprep.subr.mxu0 0.0
    %310 = vmatpush1.msra.mxu0 0.0
    %311 = vmatprep.subr.mxu0 0.0
    %312 = vmatpush1.msra.mxu0 0.0
    %313 = vmatprep.subr.mxu0 0.0
    %314 = vmatpush1.msra.mxu0 0.0
    %315 = vmatprep.subr.mxu0 0.0
    %316 = vmatpush1.msra.mxu0 0.0
    %317 = vmatprep.subr.mxu0 0.0
    %318 = vmatpush1.msra.mxu0 0.0
    %319 = vmatprep.subr.mxu0 0.0
    %320 = vmatpush1.msra.mxu0 0.0
    %321 = vmatprep.subr.mxu0 0.0
    %322 = vmatpush1.msra.mxu0 0.0
    %323 = vmatprep.subr.mxu0 0.0
    %324 = vmatpush1.msra.mxu0 0.0
    %325 = vmatprep.subr.mxu0 0.0
    %326 = vmatpush1.msra.mxu0 0.0
    %327 = vmatprep.subr.mxu0 0.0
    %328 = vmatpush1.msra.mxu0 0.0
    %329 = vmatprep.subr.mxu0 0.0
    %330 = vmatpush1.msra.mxu0 0.0
    %331 = vmatprep.subr.mxu0 0.0
    %332 = vmatpush1.msra.mxu0 0.0
    %333 = vmatprep.subr.mxu0 0.0
    %334 = vmatpush1.msra.mxu0 0.0
    %335 = vmatprep.subr.mxu0 0.0
    %336 = vmatpush1.msra.mxu0 0.0
    %337 = vmatprep.subr.mxu0 0.0
    %338 = vmatpush1.msra.mxu0 0.0
    %339 = vmatprep.subr.mxu0 0.0
    %340 = vmatpush1.msra.mxu0 0.0
    %341 = vmatprep.mubr.f32.mxu0 0.0
    %342 = vmatmul.mubr.f32.gmra.mrb[0].mxu0 %v275
    %v343 = vpop.f32.mrb[0].mxu0
    %v344 = vadd.f32 %v272, %v343
    %v345 = vpop.f32.mrb[0].mxu0
    %346 = vdwg.mxu0
    %v347 = vmax.f32 %v344, 0.0
    %v348 = vld [vmem:[%s7] sm:$0x1]
    %v350 = vlaneseq
    %v351 = vshrl.u32 %v350, 7
    %v352 = vsub.s32 0, %v351
    %v353 = vrot.slane %v348, %v352
    %v355 = vmul.f32 %v347, %v353
    %v356 = vsel %vm180, %v355, 0.0
    %357 = vadd.xlane.f32.xlu0 %v356
    %v358 = vpop.xlane.xlu0 %357
    %v359 = vld [vmem:[#allocation2] sm:$0x1]
    %v361 = vlaneseq
    %v362 = vshrl.u32 %v361, 7
    %v363 = vsub.s32 0, %v362
    %v364 = vrot.slane %v359, %v363
    %v366 = vadd.f32 %v358, %v364
    %vm367 = vcmask 7168
    %368 = vst.msk [vmem:[%s9] sm:$0xff] %vm367, %v366
    // Predicated region
    $region58: #{tpu_custom_call.1} parent=1 // pred_check
      _
    $region59: #{tpu_custom_call.1} parent=1 // pred_check_branch
      %370 = sbr.rel (0) target = $region61
    $region60: #{tpu_custom_call.1} parent=1 // pred_region
      _
    $region61: #{tpu_custom_call.1} parent=1 // pred_fallthru
      _
    // Predicated region
    $region62: #{tpu_custom_call.1} parent=1 // pred_check
      _
    $region63: #{tpu_custom_call.1} parent=1 // pred_check_branch
      %372 = sbr.rel (0) target = $region65
    $region64: #{tpu_custom_call.1} parent=1 // pred_region
      _
    $region65: #{tpu_custom_call.1} parent=1 // pred_fallthru
      _
    %373 = vsyncpa [#allocation4], 1
    %374 = vsyncpa [#allocation6], 1
    %375 = vsyncpa [#allocation9], 1

</llo_original>
